<compile_context>
chip_gen: v6e
topology: v6e:2x2x1
jax: 0.10.0
libtpu: 0.0.40
codegen_flags: <defaults>
</compile_context>

<pallas_src>
import numpy as np
import jax
import jax.numpy as jnp
from jax.experimental import pallas as pl
from jax.experimental.pallas import tpu as pltpu


# ----------------------------------------------------------------------------
# Static operator matrices (numpy, built once — pure glue).
# ----------------------------------------------------------------------------
def _adaptive_avg_pool_matrix(H, W, s):
    """(s*s, H*W) matrix reproducing nn.AdaptiveAvgPool2d((s, s)) exactly."""
    P = np.zeros((s * s, H * W), dtype=np.float32)
    for i in range(s):
        h0 = (i * H) // s
        h1 = -(-((i + 1) * H) // s)  # ceil
        for j in range(s):
            w0 = (j * W) // s
            w1 = -(-((j + 1) * W) // s)
            area = float((h1 - h0) * (w1 - w0))
            for h in range(h0, h1):
                for w in range(w0, w1):
                    P[i * s + j, h * W + w] = 1.0 / area
    return P


def _bilinear_1d(out_size, in_size):
    """(out, in) 1-D interp matrix, mode='bilinear', align_corners=False."""
    A = np.zeros((out_size, in_size), dtype=np.float32)
    scale = in_size / out_size
    for o in range(out_size):
        src = max((o + 0.5) * scale - 0.5, 0.0)
        i0 = min(int(np.floor(src)), in_size - 1)
        i1 = min(i0 + 1, in_size - 1)
        l1 = src - i0
        A[o, i0] += 1.0 - l1
        A[o, i1] += l1
    return A


def _bilinear_matrix(H, W, s):
    """(H*W, s*s) matrix == F.interpolate((s,s)->(H,W), bilinear, align_corners=False)."""
    Ah = _bilinear_1d(H, s)
    Aw = _bilinear_1d(W, s)
    return np.einsum("hi,wj->hwij", Ah, Aw).reshape(H * W, s * s).astype(np.float32)


# ----------------------------------------------------------------------------
# Pallas wrapper + kernel (NCHW-native, channels on sublanes, HW on lanes)
# ----------------------------------------------------------------------------
def pyramid_pooling_module(x_nchw, params, sizes=(1, 2, 3, 6),
                           batch_block=None, matmul_dtype=jnp.bfloat16):
    N, Cin, H, W = x_nchw.shape
    HW = H * W
    S = len(sizes)
    Cch = params["wc"].shape[-1]
    SC = S * Cch
    s2 = [s * s for s in sizes]
    P50 = int(sum(s2))
    offs = np.concatenate([[0], np.cumsum(s2)]).astype(int)
    md = matmul_dtype

    # images per grid step (amortizes per-step pipeline overhead)
    nb = N if batch_block is None else max(1, min(batch_block, N))
    while N % nb:
        nb -= 1
    G = N // nb

    # fused (unpadded) stacked static operators, channels-major orientation
    pT = np.concatenate([_adaptive_avg_pool_matrix(H, W, s).T for s in sizes],
                        axis=1)                                         # (HW, P50)
    mT = np.concatenate([_bilinear_matrix(H, W, s).T for s in sizes],
                        axis=0)                                         # (P50, HW)
    blkmask = np.zeros((SC, P50), dtype=np.float32)                     # block-diag mask
    for i in range(S):
        blkmask[i * Cch:(i + 1) * Cch, offs[i]:offs[i + 1]] = 1.0
    pT = jnp.asarray(pT, dtype=md)
    mT = jnp.asarray(mT, dtype=md)
    blkmask = jnp.asarray(blkmask)

    # stacked / transposed weights (1x1 convs act on the channel axis)
    wcT = jnp.concatenate([params["wc"][i].T for i in range(S)],
                          axis=0).astype(md)                            # (S*Cch, Cin)
    bcT = jnp.concatenate([params["bc"][i].T for i in range(S)],
                          axis=0).astype(jnp.float32)                   # (S*Cch, 1)
    wb = params["wb"]                                                   # (S*Cch + Cin, Cin)
    wbsT = wb[:SC].T.astype(md)                                         # (Cin, S*Cch)
    wbfT = wb[SC:].T.astype(md)                                         # (Cin, Cin)
    bbT = params["bb"].T.astype(jnp.float32)                            # (Cin, 1)

    # NCHW is already channels-on-sublanes / spatial-on-lanes: free reshape.
    x3 = x_nchw.reshape(N, Cin, HW).astype(md)

    def kernel(x_ref, pT_ref, mT_ref, mask_ref, wcT_ref, bcT_ref,
               wbsT_ref, wbfT_ref, bbT_ref, out_ref):
        # hoisted weight / operator loads (shared across the batch unroll)
        pTv = pT_ref[...]
        mTv = mT_ref[...]
        maskv = mask_ref[...]
        wcTv = wcT_ref[...]
        bcTv = bcT_ref[...]
        wbsTv = wbsT_ref[...]
        wbfTv = wbfT_ref[...]
        bbTv = bbT_ref[...]
        for b in range(nb):                                  # static unroll over images
            f = x_ref[b]                                     # (Cin, HW), matmul dtype
            # 1) bottleneck contribution of the identity (feats) branch
            acc = jnp.dot(wbfTv, f, preferred_element_type=jnp.float32)        # (Cin, HW)
            # 2) fused adaptive-average-pool of all stages: ONE matmul
            pooled = jnp.dot(f, pTv, preferred_element_type=jnp.float32)       # (Cin, P50)
            # 3) all stage 1x1 convs + ReLU: ONE matmul (stacked weights)
            y = jnp.maximum(
                jnp.dot(wcTv, pooled.astype(md),
                        preferred_element_type=jnp.float32) + bcTv, 0.0)       # (SC, P50)
            # block-diagonal mask keeps each stage's rows on its own columns
            ym = (y * maskv).astype(md)
            # 4) bottleneck over all pyramid branches: ONE matmul
            t = jnp.dot(wbsTv, ym, preferred_element_type=jnp.float32)         # (Cin, P50)
            # 5) fused bilinear upsample of all stages: ONE matmul
            acc = acc + jnp.dot(t.astype(md), mTv,
                                preferred_element_type=jnp.float32)            # (Cin, HW)
            # lane-dense store (last dim = HW)
            out_ref[b] = jnp.maximum(acc + bbTv, 0.0).astype(out_ref.dtype)

    out = pl.pallas_call(
        kernel,
        out_shape=jax.ShapeDtypeStruct((N, Cin, HW), x_nchw.dtype),
        grid=(G,),
        in_specs=[
            pl.BlockSpec((nb, Cin, HW), lambda g: (g, 0, 0)),   # feats (NCHW, flat spatial)
            pl.BlockSpec((HW, P50), lambda g: (0, 0)),          # fused pool operator
            pl.BlockSpec((P50, HW), lambda g: (0, 0)),          # fused upsample operator
            pl.BlockSpec((SC, P50), lambda g: (0, 0)),          # block-diagonal stage mask
            pl.BlockSpec((SC, Cin), lambda g: (0, 0)),          # stacked stage conv weights^T
            pl.BlockSpec((SC, 1), lambda g: (0, 0)),            # stacked stage conv biases^T
            pl.BlockSpec((Cin, SC), lambda g: (0, 0)),          # bottleneck (stage rows)^T
            pl.BlockSpec((Cin, Cin), lambda g: (0, 0)),         # bottleneck (feats rows)^T
            pl.BlockSpec((Cin, 1), lambda g: (0, 0)),           # bottleneck bias^T
        ],
        out_specs=pl.BlockSpec((nb, Cin, HW), lambda g: (g, 0, 0)),
        compiler_params=pltpu.CompilerParams(
            dimension_semantics=("parallel",)),
    )(x3, pT, mT, blkmask, wcT, bcT, wbsT, wbfT, bbT)

    return out.reshape(N, Cin, H, W)


# ----------------------------------------------------------------------------
# Pure-JAX reference (explicit pool / conv / upsample / concat path)
# ----------------------------------------------------------------------------
def reference_forward(x_nchw, params, sizes=(1, 2, 3, 6)):
    N, Cin, H, W = x_nchw.shape
    HW = H * W
    f = jnp.transpose(x_nchw, (0, 2, 3, 1)).reshape(N, HW, Cin)
    priors = []
    for idx, s in enumerate(sizes):
        P = jnp.asarray(_adaptive_avg_pool_matrix(H, W, s))
        M = jnp.asarray(_bilinear_matrix(H, W, s))
        pooled = jnp.einsum("ph,nhc->npc", P, f)
        y = jax.nn.relu(pooled @ params["wc"][idx] + params["bc"][idx])
        priors.append(jnp.einsum("hp,npc->nhc", M, y))
    cat = jnp.concatenate(priors + [f], axis=-1)          # (N, HW, S*Cch + Cin)
    out = jax.nn.relu(cat @ params["wb"] + params["bb"])
    return jnp.transpose(out.reshape(N, H, W, Cin), (0, 3, 1, 2))


if __name__ == "__main__":
    # small shapes consistent with the module's forward
    N, Cin, H, W = 2, 16, 12, 12
    Cch = 32
    sizes = (1, 2, 3, 6)
    S = len(sizes)
    Ctot = Cin + S * Cch

    key = jax.random.PRNGKey(0)
    k = jax.random.split(key, 5)
    params = {
        "wc": jax.random.normal(k[0], (S, Cin, Cch), jnp.float32) * 0.1,   # stage 1x1 convs
        "bc": jax.random.normal(k[1], (S, 1, Cch), jnp.float32) * 0.1,
        "wb": jax.random.normal(k[2], (Ctot, Cin), jnp.float32) * 0.1,     # bottleneck 1x1 conv
        "bb": jax.random.normal(k[3], (1, Cin), jnp.float32) * 0.1,
    }
    x = jax.random.normal(k[4], (N, Cin, H, W), jnp.float32)

    ref = jax.block_until_ready(reference_forward(x, params, sizes))

    # 1) exactness of the restructured/fused math (f32 matmul path)
    out_f32 = jax.block_until_ready(
        pyramid_pooling_module(x, params, sizes, matmul_dtype=jnp.float32))
    assert out_f32.shape == (N, Cin, H, W)
    np.testing.assert_allclose(np.asarray(out_f32), np.asarray(ref),
                               rtol=1e-3, atol=1e-3)

    # 2) default fast path: bf16 MXU operands, f32 accumulation
    out_bf16 = jax.block_until_ready(pyramid_pooling_module(x, params, sizes))
    assert out_bf16.shape == (N, Cin, H, W)
    np.testing.assert_allclose(np.asarray(out_bf16), np.asarray(ref),
                               rtol=5e-2, atol=5e-2)

    print("KERNEL_OK")
</pallas_src>

<mosaic_0001>
module attributes {stable_mosaic.version = 11 : i64} {
  func.func @kernel(%arg0: i32, %arg1: memref<2x16x144xf32, #tpu.memory_space<vmem>>, %arg2: memref<144x50xf32, #tpu.memory_space<vmem>>, %arg3: memref<50x144xf32, #tpu.memory_space<vmem>>, %arg4: memref<128x50xf32, #tpu.memory_space<vmem>>, %arg5: memref<128x16xf32, #tpu.memory_space<vmem>>, %arg6: memref<128x1xf32, #tpu.memory_space<vmem>>, %arg7: memref<16x128xf32, #tpu.memory_space<vmem>>, %arg8: memref<16x16xf32, #tpu.memory_space<vmem>>, %arg9: memref<16x1xf32, #tpu.memory_space<vmem>>, %arg10: memref<2x16x144xf32, #tpu.memory_space<vmem>>) attributes {dimension_semantics = [#tpu.dimension_semantics<parallel>], iteration_bounds = array<i64: 1>, scalar_prefetch = 0 : i64, scratch_operands = 0 : i64, tpu.core_type = #tpu.core_type<tc>, window_params = [{transform_indices = @transform_0, window_bounds = array<i64: 2, 16, 144>}, {pipeline_mode = #tpu.pipeline_mode<synchronous>, transform_indices = @transform_1, window_bounds = array<i64: 144, 50>}, {pipeline_mode = #tpu.pipeline_mode<synchronous>, transform_indices = @transform_2, window_bounds = array<i64: 50, 144>}, {pipeline_mode = #tpu.pipeline_mode<synchronous>, transform_indices = @transform_3, window_bounds = array<i64: 128, 50>}, {pipeline_mode = #tpu.pipeline_mode<synchronous>, transform_indices = @transform_4, window_bounds = array<i64: 128, 16>}, {pipeline_mode = #tpu.pipeline_mode<synchronous>, transform_indices = @transform_5, window_bounds = array<i64: 128, 1>}, {pipeline_mode = #tpu.pipeline_mode<synchronous>, transform_indices = @transform_6, window_bounds = array<i64: 16, 128>}, {pipeline_mode = #tpu.pipeline_mode<synchronous>, transform_indices = @transform_7, window_bounds = array<i64: 16, 16>}, {pipeline_mode = #tpu.pipeline_mode<synchronous>, transform_indices = @transform_8, window_bounds = array<i64: 16, 1>}, {transform_indices = @transform_9, window_bounds = array<i64: 2, 16, 144>}]} {
    %c0 = arith.constant 0 : index
    %c0_0 = arith.constant 0 : index
    %0 = vector.load %arg2[%c0, %c0_0] : memref<144x50xf32, #tpu.memory_space<vmem>>, vector<144x50xf32>
    %c0_1 = arith.constant 0 : index
    %c0_2 = arith.constant 0 : index
    %1 = vector.load %arg3[%c0_1, %c0_2] : memref<50x144xf32, #tpu.memory_space<vmem>>, vector<50x144xf32>
    %c0_3 = arith.constant 0 : index
    %c0_4 = arith.constant 0 : index
    %2 = vector.load %arg4[%c0_3, %c0_4] : memref<128x50xf32, #tpu.memory_space<vmem>>, vector<128x50xf32>
    %c0_5 = arith.constant 0 : index
    %c0_6 = arith.constant 0 : index
    %3 = vector.load %arg5[%c0_5, %c0_6] : memref<128x16xf32, #tpu.memory_space<vmem>>, vector<128x16xf32>
    %c0_7 = arith.constant 0 : index
    %c0_8 = arith.constant 0 : index
    %4 = vector.load %arg6[%c0_7, %c0_8] : memref<128x1xf32, #tpu.memory_space<vmem>>, vector<128x1xf32>
    %c0_9 = arith.constant 0 : index
    %c0_10 = arith.constant 0 : index
    %5 = vector.load %arg7[%c0_9, %c0_10] : memref<16x128xf32, #tpu.memory_space<vmem>>, vector<16x128xf32>
    %c0_11 = arith.constant 0 : index
    %c0_12 = arith.constant 0 : index
    %6 = vector.load %arg8[%c0_11, %c0_12] : memref<16x16xf32, #tpu.memory_space<vmem>>, vector<16x16xf32>
    %c0_13 = arith.constant 0 : index
    %c0_14 = arith.constant 0 : index
    %7 = vector.load %arg9[%c0_13, %c0_14] : memref<16x1xf32, #tpu.memory_space<vmem>>, vector<16x1xf32>
    %c0_15 = arith.constant 0 : index
    %c0_16 = arith.constant 0 : index
    %c0_17 = arith.constant 0 : index
    %8 = vector.load %arg1[%c0_15, %c0_16, %c0_17] : memref<2x16x144xf32, #tpu.memory_space<vmem>>, vector<1x16x144xf32>
    %9 = vector.shape_cast %8 : vector<1x16x144xf32> to vector<16x144xf32>
    %cst = arith.constant dense<0.000000e+00> : vector<16x144xf32>
    %10 = tpu.matmul %6, %9, %cst {dimension_numbers = #tpu.dot_dimension_numbers<[1], [0], [0], [1], [0, 0, 1, 1], [], []>} : vector<16x16xf32>, vector<16x144xf32>, vector<16x144xf32> -> vector<16x144xf32>
    %cst_18 = arith.constant dense<0.000000e+00> : vector<16x50xf32>
    %11 = tpu.matmul %9, %0, %cst_18 {dimension_numbers = #tpu.dot_dimension_numbers<[1], [0], [0], [1], [0, 0, 1, 1], [], []>} : vector<16x144xf32>, vector<144x50xf32>, vector<16x50xf32> -> vector<16x50xf32>
    %cst_19 = arith.constant dense<0.000000e+00> : vector<128x50xf32>
    %12 = tpu.matmul %3, %11, %cst_19 {dimension_numbers = #tpu.dot_dimension_numbers<[1], [0], [0], [1], [0, 0, 1, 1], [], []>} : vector<128x16xf32>, vector<16x50xf32>, vector<128x50xf32> -> vector<128x50xf32>
    %13 = vector.broadcast %4 : vector<128x1xf32> to vector<128x50xf32>
    %14 = arith.addf %12, %13 : vector<128x50xf32>
    %cst_20 = arith.constant 0.000000e+00 : f32
    %15 = vector.broadcast %cst_20 : f32 to vector<128x50xf32>
    %16 = arith.maximumf %14, %15 : vector<128x50xf32>
    %17 = arith.mulf %16, %2 : vector<128x50xf32>
    %cst_21 = arith.constant dense<0.000000e+00> : vector<16x50xf32>
    %18 = tpu.matmul %5, %17, %cst_21 {dimension_numbers = #tpu.dot_dimension_numbers<[1], [0], [0], [1], [0, 0, 1, 1], [], []>} : vector<16x128xf32>, vector<128x50xf32>, vector<16x50xf32> -> vector<16x50xf32>
    %cst_22 = arith.constant dense<0.000000e+00> : vector<16x144xf32>
    %19 = tpu.matmul %18, %1, %cst_22 {dimension_numbers = #tpu.dot_dimension_numbers<[1], [0], [0], [1], [0, 0, 1, 1], [], []>} : vector<16x50xf32>, vector<50x144xf32>, vector<16x144xf32> -> vector<16x144xf32>
    %20 = arith.addf %10, %19 : vector<16x144xf32>
    %21 = vector.broadcast %7 : vector<16x1xf32> to vector<16x144xf32>
    %22 = arith.addf %20, %21 : vector<16x144xf32>
    %cst_23 = arith.constant 0.000000e+00 : f32
    %23 = vector.broadcast %cst_23 : f32 to vector<16x144xf32>
    %24 = arith.maximumf %22, %23 : vector<16x144xf32>
    %c0_24 = arith.constant 0 : index
    %c0_25 = arith.constant 0 : index
    %c0_26 = arith.constant 0 : index
    %25 = vector.load %arg10[%c0_24, %c0_25, %c0_26] : memref<2x16x144xf32, #tpu.memory_space<vmem>>, vector<1x16x144xf32>
    %26 = vector.shape_cast %25 : vector<1x16x144xf32> to vector<16x144xf32>
    %27 = vector.shape_cast %24 : vector<16x144xf32> to vector<1x16x144xf32>
    tpu.vector_store %arg10[%c0_24, %c0_25, %c0_26], %27 {strides = array<i32>} : memref<2x16x144xf32, #tpu.memory_space<vmem>>, vector<1x16x144xf32>,
    %c1 = arith.constant 1 : index
    %c0_27 = arith.constant 0 : index
    %c0_28 = arith.constant 0 : index
    %28 = vector.load %arg1[%c1, %c0_27, %c0_28] : memref<2x16x144xf32, #tpu.memory_space<vmem>>, vector<1x16x144xf32>
    %29 = vector.shape_cast %28 : vector<1x16x144xf32> to vector<16x144xf32>
    %cst_29 = arith.constant dense<0.000000e+00> : vector<16x144xf32>
    %30 = tpu.matmul %6, %29, %cst_29 {dimension_numbers = #tpu.dot_dimension_numbers<[1], [0], [0], [1], [0, 0, 1, 1], [], []>} : vector<16x16xf32>, vector<16x144xf32>, vector<16x144xf32> -> vector<16x144xf32>
    %cst_30 = arith.constant dense<0.000000e+00> : vector<16x50xf32>
    %31 = tpu.matmul %29, %0, %cst_30 {dimension_numbers = #tpu.dot_dimension_numbers<[1], [0], [0], [1], [0, 0, 1, 1], [], []>} : vector<16x144xf32>, vector<144x50xf32>, vector<16x50xf32> -> vector<16x50xf32>
    %cst_31 = arith.constant dense<0.000000e+00> : vector<128x50xf32>
    %32 = tpu.matmul %3, %31, %cst_31 {dimension_numbers = #tpu.dot_dimension_numbers<[1], [0], [0], [1], [0, 0, 1, 1], [], []>} : vector<128x16xf32>, vector<16x50xf32>, vector<128x50xf32> -> vector<128x50xf32>
    %33 = vector.broadcast %4 : vector<128x1xf32> to vector<128x50xf32>
    %34 = arith.addf %32, %33 : vector<128x50xf32>
    %cst_32 = arith.constant 0.000000e+00 : f32
    %35 = vector.broadcast %cst_32 : f32 to vector<128x50xf32>
    %36 = arith.maximumf %34, %35 : vector<128x50xf32>
    %37 = arith.mulf %36, %2 : vector<128x50xf32>
    %cst_33 = arith.constant dense<0.000000e+00> : vector<16x50xf32>
    %38 = tpu.matmul %5, %37, %cst_33 {dimension_numbers = #tpu.dot_dimension_numbers<[1], [0], [0], [1], [0, 0, 1, 1], [], []>} : vector<16x128xf32>, vector<128x50xf32>, vector<16x50xf32> -> vector<16x50xf32>
    %cst_34 = arith.constant dense<0.000000e+00> : vector<16x144xf32>
    %39 = tpu.matmul %38, %1, %cst_34 {dimension_numbers = #tpu.dot_dimension_numbers<[1], [0], [0], [1], [0, 0, 1, 1], [], []>} : vector<16x50xf32>, vector<50x144xf32>, vector<16x144xf32> -> vector<16x144xf32>
    %40 = arith.addf %30, %39 : vector<16x144xf32>
    %41 = vector.broadcast %7 : vector<16x1xf32> to vector<16x144xf32>
    %42 = arith.addf %40, %41 : vector<16x144xf32>
    %cst_35 = arith.constant 0.000000e+00 : f32
    %43 = vector.broadcast %cst_35 : f32 to vector<16x144xf32>
    %44 = arith.maximumf %42, %43 : vector<16x144xf32>
    %c1_36 = arith.constant 1 : index
    %c0_37 = arith.constant 0 : index
    %c0_38 = arith.constant 0 : index
    %45 = vector.load %arg10[%c1_36, %c0_37, %c0_38] : memref<2x16x144xf32, #tpu.memory_space<vmem>>, vector<1x16x144xf32>
    %46 = vector.shape_cast %45 : vector<1x16x144xf32> to vector<16x144xf32>
    %47 = vector.shape_cast %44 : vector<16x144xf32> to vector<1x16x144xf32>
    tpu.vector_store %arg10[%c1_36, %c0_37, %c0_38], %47 {strides = array<i32>} : memref<2x16x144xf32, #tpu.memory_space<vmem>>, vector<1x16x144xf32>,
    return
  }
  func.func @transform_0(%arg0: i32) -> (i32, i32, i32) {
    %c0_i32 = arith.constant 0 : i32
    %c0_i32_0 = arith.constant 0 : i32
    %c0_i32_1 = arith.constant 0 : i32
    return %arg0, %c0_i32, %c0_i32_0 : i32, i32, i32
  }
  func.func @transform_1(%arg0: i32) -> (i32, i32) {
    %c0_i32 = arith.constant 0 : i32
    %c0_i32_0 = arith.constant 0 : i32
    %c0_i32_1 = arith.constant 0 : i32
    return %c0_i32, %c0_i32_0 : i32, i32
  }
  func.func @transform_2(%arg0: i32) -> (i32, i32) {
    %c0_i32 = arith.constant 0 : i32
    %c0_i32_0 = arith.constant 0 : i32
    %c0_i32_1 = arith.constant 0 : i32
    return %c0_i32, %c0_i32_0 : i32, i32
  }
  func.func @transform_3(%arg0: i32) -> (i32, i32) {
    %c0_i32 = arith.constant 0 : i32
    %c0_i32_0 = arith.constant 0 : i32
    %c0_i32_1 = arith.constant 0 : i32
    return %c0_i32, %c0_i32_0 : i32, i32
  }
  func.func @transform_4(%arg0: i32) -> (i32, i32) {
    %c0_i32 = arith.constant 0 : i32
    %c0_i32_0 = arith.constant 0 : i32
    %c0_i32_1 = arith.constant 0 : i32
    return %c0_i32, %c0_i32_0 : i32, i32
  }
  func.func @transform_5(%arg0: i32) -> (i32, i32) {
    %c0_i32 = arith.constant 0 : i32
    %c0_i32_0 = arith.constant 0 : i32
    %c0_i32_1 = arith.constant 0 : i32
    return %c0_i32, %c0_i32_0 : i32, i32
  }
  func.func @transform_6(%arg0: i32) -> (i32, i32) {
    %c0_i32 = arith.constant 0 : i32
    %c0_i32_0 = arith.constant 0 : i32
    %c0_i32_1 = arith.constant 0 : i32
    return %c0_i32, %c0_i32_0 : i32, i32
  }
  func.func @transform_7(%arg0: i32) -> (i32, i32) {
    %c0_i32 = arith.constant 0 : i32
    %c0_i32_0 = arith.constant 0 : i32
    %c0_i32_1 = arith.constant 0 : i32
    return %c0_i32, %c0_i32_0 : i32, i32
  }
  func.func @transform_8(%arg0: i32) -> (i32, i32) {
    %c0_i32 = arith.constant 0 : i32
    %c0_i32_0 = arith.constant 0 : i32
    %c0_i32_1 = arith.constant 0 : i32
    return %c0_i32, %c0_i32_0 : i32, i32
  }
  func.func @transform_9(%arg0: i32) -> (i32, i32, i32) {
    %c0_i32 = arith.constant 0 : i32
    %c0_i32_0 = arith.constant 0 : i32
    %c0_i32_1 = arith.constant 0 : i32
    return %arg0, %c0_i32, %c0_i32_0 : i32, i32, i32
  }
}

</mosaic_0001>

<llo_original>
// kernel: tpu_custom_call.1
$region0: #{tpu_custom_call.1}
  #allocation0 [shape = 'u32[]', space=smem, size = 0x4, offset = 0x4, fixed_abs, tag = 'smem constant byte address 0x4 - core index']
  #allocation1 [shape = 'u32[144,128]{1,0:T(1,128)}', space=vmem, size = 0x12000, scoped, tag = 'internal scratch']
  %s0 = inlined_call_operand.vmem [shape: f32[2,16,144], index: 0, kind: input, shape index: {}]
  %s1 = inlined_call_operand.vmem [shape: f32[144,50], index: 1, kind: input, shape index: {}]
  %s2 = inlined_call_operand.vmem [shape: f32[50,144], index: 2, kind: input, shape index: {}]
  %s3 = inlined_call_operand.vmem [shape: f32[128,50], index: 3, kind: input, shape index: {}]
  %s4 = inlined_call_operand.vmem [shape: f32[128,16], index: 4, kind: input, shape index: {}]
  %s5 = inlined_call_operand.vmem [shape: f32[128,1], index: 5, kind: input, shape index: {}]
  %s6 = inlined_call_operand.vmem [shape: f32[16,128], index: 6, kind: input, shape index: {}]
  %s7 = inlined_call_operand.vmem [shape: f32[16,16], index: 7, kind: input, shape index: {}]
  %s8 = inlined_call_operand.vmem [shape: f32[16,1], index: 8, kind: input, shape index: {}]
  %s9 = inlined_call_operand.hbm [shape: f32[2,16,144], index: 9, kind: output, shape index: {}]
  %s10 = sld [smem:[#allocation0]]
  $region46: #{tpu_custom_call.1} parent=0
    _
  %s12 = ssub.s32 1, %s10
  %s13 = scalar_select 0, %s12, %s10
  $region1: #{tpu_custom_call.1} parent=0
    #allocation2 [shape = 'u8[32768]{0}', space=vmem, size = 0x8000, scoped, tag = 'output window, operand 0, single buffered']
    #allocation3 [shape = 's32[1]{0}', space=sflag, size = 0x4, scoped, tag = 'scoped memory for tpu_custom_call.1']
    %14 = vsyncpa [#allocation3], 0
    // Predicated region
    $region2: #{tpu_custom_call.1} parent=1 // pred_check
      _
    $region3: #{tpu_custom_call.1} parent=1 // pred_check_branch
      %16 = sbr.rel (0) target = $region5
    $region4: #{tpu_custom_call.1} parent=1 // pred_region
      _
    $region5: #{tpu_custom_call.1} parent=1 // pred_fallthru
      _
    // Predicated region
    $region6: #{tpu_custom_call.1} parent=1 // pred_check
      _
    $region7: #{tpu_custom_call.1} parent=1 // pred_check_branch
      %18 = sbr.rel (0) target = $region9
    $region8: #{tpu_custom_call.1} parent=1 // pred_region
      _
    $region9: #{tpu_custom_call.1} parent=1 // pred_fallthru
      _
    // Predicated region
    $region10: #{tpu_custom_call.1} parent=1 // pred_check
      _
    $region11: #{tpu_custom_call.1} parent=1 // pred_check_branch
      %20 = sbr.rel (0) target = $region13
    $region12: #{tpu_custom_call.1} parent=1 // pred_region
      _
    $region13: #{tpu_custom_call.1} parent=1 // pred_fallthru
      _
    // Predicated region
    $region14: #{tpu_custom_call.1} parent=1 // pred_check
      _
    $region15: #{tpu_custom_call.1} parent=1 // pred_check_branch
      %22 = sbr.rel (0) target = $region17
    $region16: #{tpu_custom_call.1} parent=1 // pred_region
      _
    $region17: #{tpu_custom_call.1} parent=1 // pred_fallthru
      _
    // Predicated region
    $region18: #{tpu_custom_call.1} parent=1 // pred_check
      _
    $region19: #{tpu_custom_call.1} parent=1 // pred_check_branch
      %24 = sbr.rel (0) target = $region21
    $region20: #{tpu_custom_call.1} parent=1 // pred_region
      _
    $region21: #{tpu_custom_call.1} parent=1 // pred_fallthru
      _
    // Predicated region
    $region22: #{tpu_custom_call.1} parent=1 // pred_check
      _
    $region23: #{tpu_custom_call.1} parent=1 // pred_check_branch
      %26 = sbr.rel (0) target = $region25
    $region24: #{tpu_custom_call.1} parent=1 // pred_region
      _
    $region25: #{tpu_custom_call.1} parent=1 // pred_fallthru
      _
    // Predicated region
    $region26: #{tpu_custom_call.1} parent=1 // pred_check
      _
    $region27: #{tpu_custom_call.1} parent=1 // pred_check_branch
      %28 = sbr.rel (0) target = $region29
    $region28: #{tpu_custom_call.1} parent=1 // pred_region
      _
    $region29: #{tpu_custom_call.1} parent=1 // pred_fallthru
      _
    // Predicated region
    $region30: #{tpu_custom_call.1} parent=1 // pred_check
      _
    $region31: #{tpu_custom_call.1} parent=1 // pred_check_branch
      %30 = sbr.rel (0) target = $region33
    $region32: #{tpu_custom_call.1} parent=1 // pred_region
      _
    $region33: #{tpu_custom_call.1} parent=1 // pred_fallthru
      _
    // Predicated region
    $region34: #{tpu_custom_call.1} parent=1 // pred_check
      _
    $region35: #{tpu_custom_call.1} parent=1 // pred_check_branch
      %32 = sbr.rel (0) target = $region37
    $region36: #{tpu_custom_call.1} parent=1 // pred_region
      _
    $region37: #{tpu_custom_call.1} parent=1 // pred_fallthru
      _
    %v33 = vld [vmem:[%s1] sm:$0xff]
    %v34 = vld [vmem:[%s1 + $0x8] sm:$0xff]
    %v35 = vld [vmem:[%s1 + $0x10] sm:$0xff]
    %v36 = vld [vmem:[%s1 + $0x18] sm:$0xff]
    %v37 = vld [vmem:[%s1 + $0x20] sm:$0xff]
    %v38 = vld [vmem:[%s1 + $0x28] sm:$0xff]
    %v39 = vld [vmem:[%s1 + $0x30] sm:$0xff]
    %v40 = vld [vmem:[%s1 + $0x38] sm:$0xff]
    %v41 = vld [vmem:[%s1 + $0x40] sm:$0xff]
    %v42 = vld [vmem:[%s1 + $0x48] sm:$0xff]
    %v43 = vld [vmem:[%s1 + $0x50] sm:$0xff]
    %v44 = vld [vmem:[%s1 + $0x58] sm:$0xff]
    %v45 = vld [vmem:[%s1 + $0x60] sm:$0xff]
    %v46 = vld [vmem:[%s1 + $0x68] sm:$0xff]
    %v47 = vld [vmem:[%s1 + $0x70] sm:$0xff]
    %v48 = vld [vmem:[%s1 + $0x78] sm:$0xff]
    %v49 = vld [vmem:[%s1 + $0x80] sm:$0xff]
    %v50 = vld [vmem:[%s1 + $0x88] sm:$0xff]
    %v51 = vld [vmem:[%s2] sm:$0xff]
    %v52 = vld [vmem:[%s2 + $0x8] sm:$0xff]
    %v53 = vld [vmem:[%s2 + $0x10] sm:$0xff]
    %v54 = vld [vmem:[%s2 + $0x18] sm:$0xff]
    %v55 = vld [vmem:[%s2 + $0x20] sm:$0xff]
    %v56 = vld [vmem:[%s2 + $0x28] sm:$0xff]
    %v57 = vld [vmem:[%s2 + $0x30] sm:$0xff]
    %v58 = vld [vmem:[%s2 + $0x38] sm:$0xff]
    %v59 = vld [vmem:[%s2 + $0x40] sm:$0xff]
    %v60 = vld [vmem:[%s2 + $0x48] sm:$0xff]
    %v61 = vld [vmem:[%s2 + $0x50] sm:$0xff]
    %v62 = vld [vmem:[%s2 + $0x58] sm:$0xff]
    %v63 = vld [vmem:[%s2 + $0x60] sm:$0x3]
    %v64 = vld [vmem:[%s2 + $0x68] sm:$0x3]
    %v65 = vld [vmem:[%s3] sm:$0xff]
    %v66 = vld [vmem:[%s3 + $0x8] sm:$0xff]
    %v67 = vld [vmem:[%s3 + $0x10] sm:$0xff]
    %v68 = vld [vmem:[%s3 + $0x18] sm:$0xff]
    %v69 = vld [vmem:[%s3 + $0x20] sm:$0xff]
    %v70 = vld [vmem:[%s3 + $0x28] sm:$0xff]
    %v71 = vld [vmem:[%s3 + $0x30] sm:$0xff]
    %v72 = vld [vmem:[%s3 + $0x38] sm:$0xff]
    %v73 = vld [vmem:[%s3 + $0x40] sm:$0xff]
    %v74 = vld [vmem:[%s3 + $0x48] sm:$0xff]
    %v75 = vld [vmem:[%s3 + $0x50] sm:$0xff]
    %v76 = vld [vmem:[%s3 + $0x58] sm:$0xff]
    %v77 = vld [vmem:[%s3 + $0x60] sm:$0xff]
    %v78 = vld [vmem:[%s3 + $0x68] sm:$0xff]
    %v79 = vld [vmem:[%s3 + $0x70] sm:$0xff]
    %v80 = vld [vmem:[%s3 + $0x78] sm:$0xff]
    %v81 = vld [vmem:[%s4] sm:$0xff]
    %v82 = vld [vmem:[%s4 + $0x8] sm:$0xff]
    %v83 = vld [vmem:[%s4 + $0x10] sm:$0xff]
    %v84 = vld [vmem:[%s4 + $0x18] sm:$0xff]
    %v85 = vld [vmem:[%s4 + $0x20] sm:$0xff]
    %v86 = vld [vmem:[%s4 + $0x28] sm:$0xff]
    %v87 = vld [vmem:[%s4 + $0x30] sm:$0xff]
    %v88 = vld [vmem:[%s4 + $0x38] sm:$0xff]
    %v89 = vld [vmem:[%s4 + $0x40] sm:$0xff]
    %v90 = vld [vmem:[%s4 + $0x48] sm:$0xff]
    %v91 = vld [vmem:[%s4 + $0x50] sm:$0xff]
    %v92 = vld [vmem:[%s4 + $0x58] sm:$0xff]
    %v93 = vld [vmem:[%s4 + $0x60] sm:$0xff]
    %v94 = vld [vmem:[%s4 + $0x68] sm:$0xff]
    %v95 = vld [vmem:[%s4 + $0x70] sm:$0xff]
    %v96 = vld [vmem:[%s4 + $0x78] sm:$0xff]
    %v97 = vld [vmem:[%s5] sm:$0xff]
    %v98 = vld [vmem:[%s5 + $0x8] sm:$0xff]
    %v99 = vld [vmem:[%s5 + $0x10] sm:$0xff]
    %v100 = vld [vmem:[%s5 + $0x18] sm:$0xff]
    %v101 = vld [vmem:[%s5 + $0x20] sm:$0xff]
    %v102 = vld [vmem:[%s5 + $0x28] sm:$0xff]
    %v103 = vld [vmem:[%s5 + $0x30] sm:$0xff]
    %v104 = vld [vmem:[%s5 + $0x38] sm:$0xff]
    %v105 = vld [vmem:[%s5 + $0x40] sm:$0xff]
    %v106 = vld [vmem:[%s5 + $0x48] sm:$0xff]
    %v107 = vld [vmem:[%s5 + $0x50] sm:$0xff]
    %v108 = vld [vmem:[%s5 + $0x58] sm:$0xff]
    %v109 = vld [vmem:[%s5 + $0x60] sm:$0xff]
    %v110 = vld [vmem:[%s5 + $0x68] sm:$0xff]
    %v111 = vld [vmem:[%s5 + $0x70] sm:$0xff]
    %v112 = vld [vmem:[%s5 + $0x78] sm:$0xff]
    %v113 = vld [vmem:[%s6] sm:$0xff]
    %v114 = vld [vmem:[%s6 + $0x8] sm:$0xff]
    %v115 = vld [vmem:[%s7] sm:$0xff]
    %v116 = vld [vmem:[%s7 + $0x8] sm:$0xff]
    %v117 = vld [vmem:[%s8] sm:$0xff]
    %v118 = vld [vmem:[%s8 + $0x8] sm:$0xff]
    %v119 = vld [vmem:[%s0] sm:$0xff]
    %v120 = vld [vmem:[%s0 + $0x8] sm:$0xff]
    %v121 = vld [vmem:[%s0 + $0x10] sm:$0xff]
    %v122 = vld [vmem:[%s0 + $0x18] sm:$0xff]
    %vm123 = vcmask 130048
    %v125 = vsel %vm123, %v120, 0
    %v128 = vsel %vm123, %v122, 0
    %130 = vmatprep.subr.mxu0 0.0
    %131 = vmatpush1.msra.mxu0 %v48
    %132 = vmatprep.subr.mxu0 0.0
    %133 = vmatpush1.msra.mxu0 %v47
    %134 = vmatprep.subr.mxu0 0.0
    %135 = vmatpush1.msra.mxu0 %v46
    %136 = vmatprep.subr.mxu0 0.0
    %137 = vmatpush1.msra.mxu0 %v45
    %138 = vmatprep.subr.mxu0 0.0
    %139 = vmatpush1.msra.mxu0 %v44
    %140 = vmatprep.subr.mxu0 0.0
    %141 = vmatpush1.msra.mxu0 %v43
    %142 = vmatprep.subr.mxu0 0.0
    %143 = vmatpush1.msra.mxu0 %v42
    %144 = vmatprep.subr.mxu0 0.0
    %145 = vmatpush1.msra.mxu0 %v41
    %146 = vmatprep.subr.mxu0 0.0
    %147 = vmatpush1.msra.mxu0 %v40
    %148 = vmatprep.subr.mxu0 0.0
    %149 = vmatpush1.msra.mxu0 %v39
    %150 = vmatprep.subr.mxu0 0.0
    %151 = vmatpush1.msra.mxu0 %v38
    %152 = vmatprep.subr.mxu0 0.0
    %153 = vmatpush1.msra.mxu0 %v37
    %154 = vmatprep.subr.mxu0 0.0
    %155 = vmatpush1.msra.mxu0 %v36
    %156 = vmatprep.subr.mxu0 0.0
    %157 = vmatpush1.msra.mxu0 %v35
    %158 = vmatprep.subr.mxu0 0.0
    %159 = vmatpush1.msra.mxu0 %v34
    %160 = vmatprep.subr.mxu0 0.0
    %161 = vmatpush1.msra.mxu0 %v33
    %162 = vmatprep.subr.mxu0 0.0
    %163 = vmatpush2.msra.mxu0 0.0
    %164 = vmatprep.subr.mxu0 0.0
    %165 = vmatpush2.msra.mxu0 0.0
    %166 = vmatprep.subr.mxu0 0.0
    %167 = vmatpush2.msra.mxu0 0.0
    %168 = vmatprep.subr.mxu0 0.0
    %169 = vmatpush2.msra.mxu0 0.0
    %170 = vmatprep.subr.mxu0 0.0
    %171 = vmatpush2.msra.mxu0 0.0
    %172 = vmatprep.subr.mxu0 0.0
    %173 = vmatpush2.msra.mxu0 0.0
    %174 = vmatprep.subr.mxu0 0.0
    %175 = vmatpush2.msra.mxu0 0.0
    %176 = vmatprep.subr.mxu0 0.0
    %177 = vmatpush2.msra.mxu0 0.0
    %178 = vmatprep.subr.mxu0 0.0
    %179 = vmatpush2.msra.mxu0 0.0
    %180 = vmatprep.subr.mxu0 0.0
    %181 = vmatpush2.msra.mxu0 0.0
    %182 = vmatprep.subr.mxu0 0.0
    %183 = vmatpush2.msra.mxu0 0.0
    %184 = vmatprep.subr.mxu0 0.0
    %185 = vmatpush2.msra.mxu0 0.0
    %186 = vmatprep.subr.mxu0 0.0
    %187 = vmatpush2.msra.mxu0 0.0
    %188 = vmatprep.subr.mxu0 0.0
    %189 = vmatpush2.msra.mxu0 0.0
    %190 = vmatprep.subr.mxu0 0.0
    %191 = vmatpush2.msra.mxu0 %v50
    %192 = vmatprep.subr.mxu0 0.0
    %193 = vmatpush2.msra.mxu0 %v49
    %194 = vmatprep.mubr.f32.mxu0 %v125
    %195 = vmatmul.mubr.f32.gmra.mxu0 %v119
    %v196 = vpop.f32.mrf.mxu0
    %v197 = vadd.f32 0.0, %v196
    %v198 = vpop.f32.mrf.mxu0
    %199 = vmatprep.mubr.f32.mxu0 %v128
    %200 = vmatmul.mubr.f32.gmra.mxu0 %v121
    %v201 = vpop.f32.mrf.mxu0
    %v202 = vadd.f32 0.0, %v201
    %v203 = vpop.f32.mrf.mxu0
    %204 = vdwg.mxu0
    %206 = vset.pattern.permute.xlu0 0
    %207 = vperm.xlu0 %206, %v97
    %v208 = vpop.permute.xlu0 %207
    %211 = vset.pattern.permute.xlu0 0
    %212 = vperm.xlu0 %211, %v98
    %v213 = vpop.permute.xlu0 %212
    %216 = vset.pattern.permute.xlu0 0
    %217 = vperm.xlu0 %216, %v99
    %v218 = vpop.permute.xlu0 %217
    %221 = vset.pattern.permute.xlu0 0
    %222 = vperm.xlu0 %221, %v100
    %v223 = vpop.permute.xlu0 %222
    %226 = vset.pattern.permute.xlu0 0
    %227 = vperm.xlu0 %226, %v101
    %v228 = vpop.permute.xlu0 %227
    %231 = vset.pattern.permute.xlu0 0
    %232 = vperm.xlu0 %231, %v102
    %v233 = vpop.permute.xlu0 %232
    %236 = vset.pattern.permute.xlu0 0
    %237 = vperm.xlu0 %236, %v103
    %v238 = vpop.permute.xlu0 %237
    %241 = vset.pattern.permute.xlu0 0
    %242 = vperm.xlu0 %241, %v104
    %v243 = vpop.permute.xlu0 %242
    %246 = vset.pattern.permute.xlu0 0
    %247 = vperm.xlu0 %246, %v105
    %v248 = vpop.permute.xlu0 %247
    %251 = vset.pattern.permute.xlu0 0
    %252 = vperm.xlu0 %251, %v106
    %v253 = vpop.permute.xlu0 %252
    %256 = vset.pattern.permute.xlu0 0
    %257 = vperm.xlu0 %256, %v107
    %v258 = vpop.permute.xlu0 %257
    %261 = vset.pattern.permute.xlu0 0
    %262 = vperm.xlu0 %261, %v108
    %v263 = vpop.permute.xlu0 %262
    %266 = vset.pattern.permute.xlu0 0
    %267 = vperm.xlu0 %266, %v109
    %v268 = vpop.permute.xlu0 %267
    %271 = vset.pattern.permute.xlu0 0
    %272 = vperm.xlu0 %271, %v110
    %v273 = vpop.permute.xlu0 %272
    %276 = vset.pattern.permute.xlu0 0
    %277 = vperm.xlu0 %276, %v111
    %v278 = vpop.permute.xlu0 %277
    %281 = vset.pattern.permute.xlu0 0
    %282 = vperm.xlu0 %281, %v112
    %v283 = vpop.permute.xlu0 %282
    %v286 = vsel %vm123, %v81, 0
    %v289 = vsel %vm123, %v82, 0
    %v292 = vsel %vm123, %v83, 0
    %v295 = vsel %vm123, %v84, 0
    %v298 = vsel %vm123, %v85, 0
    %v301 = vsel %vm123, %v86, 0
    %v304 = vsel %vm123, %v87, 0
    %v307 = vsel %vm123, %v88, 0
    %v310 = vsel %vm123, %v89, 0
    %v313 = vsel %vm123, %v90, 0
    %v316 = vsel %vm123, %v91, 0
    %v319 = vsel %vm123, %v92, 0
    %v322 = vsel %vm123, %v93, 0
    %v325 = vsel %vm123, %v94, 0
    %v328 = vsel %vm123, %v95, 0
    %v331 = vsel %vm123, %v96, 0
    %333 = vmatprep.subr.mxu0 0.0
    %334 = vmatpush1.msra.mxu0 0.0
    %335 = vmatprep.subr.mxu0 0.0
    %336 = vmatpush1.msra.mxu0 0.0
    %337 = vmatprep.subr.mxu0 0.0
    %338 = vmatpush1.msra.mxu0 0.0
    %339 = vmatprep.subr.mxu0 0.0
    %340 = vmatpush1.msra.mxu0 0.0
    %341 = vmatprep.subr.mxu0 0.0
    %342 = vmatpush1.msra.mxu0 0.0
    %343 = vmatprep.subr.mxu0 0.0
    %344 = vmatpush1.msra.mxu0 0.0
    %345 = vmatprep.subr.mxu0 0.0
    %346 = vmatpush1.msra.mxu0 0.0
    %347 = vmatprep.subr.mxu0 0.0
    %348 = vmatpush1.msra.mxu0 0.0
    %349 = vmatprep.subr.mxu0 0.0
    %350 = vmatpush1.msra.mxu0 0.0
    %351 = vmatprep.subr.mxu0 0.0
    %352 = vmatpush1.msra.mxu0 0.0
    %353 = vmatprep.subr.mxu0 0.0
    %354 = vmatpush1.msra.mxu0 0.0
    %355 = vmatprep.subr.mxu0 0.0
    %356 = vmatpush1.msra.mxu0 0.0
    %357 = vmatprep.subr.mxu0 0.0
    %358 = vmatpush1.msra.mxu0 0.0
    %359 = vmatprep.subr.mxu0 0.0
    %360 = vmatpush1.msra.mxu0 0.0
    %361 = vmatprep.subr.mxu0 0.0
    %362 = vmatpush1.msra.mxu0 %v202
    %363 = vmatprep.subr.mxu0 0.0
    %364 = vmatpush1.msra.mxu0 %v197
    %365 = vmatprep.subr.mxu0 0.0
    %366 = vmatpush2.msra.mxu0 0.0
    %367 = vmatprep.subr.mxu0 0.0
    %368 = vmatpush2.msra.mxu0 0.0
    %369 = vmatprep.subr.mxu0 0.0
    %370 = vmatpush2.msra.mxu0 0.0
    %371 = vmatprep.subr.mxu0 0.0
    %372 = vmatpush2.msra.mxu0 0.0
    %373 = vmatprep.subr.mxu0 0.0
    %374 = vmatpush2.msra.mxu0 0.0
    %375 = vmatprep.subr.mxu0 0.0
    %376 = vmatpush2.msra.mxu0 0.0
    %377 = vmatprep.subr.mxu0 0.0
    %378 = vmatpush2.msra.mxu0 0.0
    %379 = vmatprep.subr.mxu0 0.0
    %380 = vmatpush2.msra.mxu0 0.0
    %381 = vmatprep.subr.mxu0 0.0
    %382 = vmatpush2.msra.mxu0 0.0
    %383 = vmatprep.subr.mxu0 0.0
    %384 = vmatpush2.msra.mxu0 0.0
    %385 = vmatprep.subr.mxu0 0.0
    %386 = vmatpush2.msra.mxu0 0.0
    %387 = vmatprep.subr.mxu0 0.0
    %388 = vmatpush2.msra.mxu0 0.0
    %389 = vmatprep.subr.mxu0 0.0
    %390 = vmatpush2.msra.mxu0 0.0
    %391 = vmatprep.subr.mxu0 0.0
    %392 = vmatpush2.msra.mxu0 0.0
    %393 = vmatprep.subr.mxu0 0.0
    %394 = vmatpush2.msra.mxu0 0.0
    %395 = vmatprep.subr.mxu0 0.0
    %396 = vmatpush2.msra.mxu0 0.0
    %397 = vmatprep.mubr.f32.mxu0 0.0
    %398 = vmatmul.mubr.f32.gmra.mxu0 %v286
    %v399 = vpop.f32.mrf.mxu0
    %v400 = vadd.f32 %v208, %v399
    %v401 = vpop.f32.mrf.mxu0
    %402 = vmatprep.mubr.f32.mxu0 0.0
    %403 = vmatmul.mubr.f32.gmra.mxu0 %v289
    %v404 = vpop.f32.mrf.mxu0
    %v405 = vadd.f32 %v213, %v404
    %v406 = vpop.f32.mrf.mxu0
    %407 = vmatprep.mubr.f32.mxu0 0.0
    %408 = vmatmul.mubr.f32.gmra.mxu0 %v292
    %v409 = vpop.f32.mrf.mxu0
    %v410 = vadd.f32 %v218, %v409
    %v411 = vpop.f32.mrf.mxu0
    %412 = vmatprep.mubr.f32.mxu0 0.0
    %413 = vmatmul.mubr.f32.gmra.mxu0 %v295
    %v414 = vpop.f32.mrf.mxu0
    %v415 = vadd.f32 %v223, %v414
    %v416 = vpop.f32.mrf.mxu0
    %417 = vmatprep.mubr.f32.mxu0 0.0
    %418 = vmatmul.mubr.f32.gmra.mxu0 %v298
    %v419 = vpop.f32.mrf.mxu0
    %v420 = vadd.f32 %v228, %v419
    %v421 = vpop.f32.mrf.mxu0
    %422 = vmatprep.mubr.f32.mxu0 0.0
    %423 = vmatmul.mubr.f32.gmra.mxu0 %v301
    %v424 = vpop.f32.mrf.mxu0
    %v425 = vadd.f32 %v233, %v424
    %v426 = vpop.f32.mrf.mxu0
    %427 = vmatprep.mubr.f32.mxu0 0.0
    %428 = vmatmul.mubr.f32.gmra.mxu0 %v304
    %v429 = vpop.f32.mrf.mxu0
    %v430 = vadd.f32 %v238, %v429
    %v431 = vpop.f32.mrf.mxu0
    %432 = vmatprep.mubr.f32.mxu0 0.0
    %433 = vmatmul.mubr.f32.gmra.mxu0 %v307
    %v434 = vpop.f32.mrf.mxu0
    %v435 = vadd.f32 %v243, %v434
    %v436 = vpop.f32.mrf.mxu0
    %437 = vmatprep.mubr.f32.mxu0 0.0
    %438 = vmatmul.mubr.f32.gmra.mxu0 %v310
    %v439 = vpop.f32.mrf.mxu0
    %v440 = vadd.f32 %v248, %v439
    %v441 = vpop.f32.mrf.mxu0
    %442 = vmatprep.mubr.f32.mxu0 0.0
    %443 = vmatmul.mubr.f32.gmra.mxu0 %v313
    %v444 = vpop.f32.mrf.mxu0
    %v445 = vadd.f32 %v253, %v444
    %v446 = vpop.f32.mrf.mxu0
    %447 = vmatprep.mubr.f32.mxu0 0.0
    %448 = vmatmul.mubr.f32.gmra.mxu0 %v316
    %v449 = vpop.f32.mrf.mxu0
    %v450 = vadd.f32 %v258, %v449
    %v451 = vpop.f32.mrf.mxu0
    %452 = vmatprep.mubr.f32.mxu0 0.0
    %453 = vmatmul.mubr.f32.gmra.mxu0 %v319
    %v454 = vpop.f32.mrf.mxu0
    %v455 = vadd.f32 %v263, %v454
    %v456 = vpop.f32.mrf.mxu0
    %457 = vmatprep.mubr.f32.mxu0 0.0
    %458 = vmatmul.mubr.f32.gmra.mxu0 %v322
    %v459 = vpop.f32.mrf.mxu0
    %v460 = vadd.f32 %v268, %v459
    %v461 = vpop.f32.mrf.mxu0
    %462 = vmatprep.mubr.f32.mxu0 0.0
    %463 = vmatmul.mubr.f32.gmra.mxu0 %v325
    %v464 = vpop.f32.mrf.mxu0
    %v465 = vadd.f32 %v273, %v464
    %v466 = vpop.f32.mrf.mxu0
    %467 = vmatprep.mubr.f32.mxu0 0.0
    %468 = vmatmul.mubr.f32.gmra.mxu0 %v328
    %v469 = vpop.f32.mrf.mxu0
    %v470 = vadd.f32 %v278, %v469
    %v471 = vpop.f32.mrf.mxu0
    %472 = vmatprep.mubr.f32.mxu0 0.0
    %473 = vmatmul.mubr.f32.gmra.mxu0 %v331
    %v474 = vpop.f32.mrf.mxu0
    %v475 = vadd.f32 %v283, %v474
    %v476 = vpop.f32.mrf.mxu0
    %477 = vdwg.mxu0
    %v478 = vmax.f32 %v400, 0.0
    %v479 = vmax.f32 %v405, 0.0
    %v480 = vmax.f32 %v410, 0.0
    %v481 = vmax.f32 %v415, 0.0
    %v482 = vmax.f32 %v420, 0.0
    %v483 = vmax.f32 %v425, 0.0
    %v484 = vmax.f32 %v430, 0.0
    %v485 = vmax.f32 %v435, 0.0
    %v486 = vmax.f32 %v440, 0.0
    %v487 = vmax.f32 %v445, 0.0
    %v488 = vmax.f32 %v450, 0.0
    %v489 = vmax.f32 %v455, 0.0
    %v490 = vmax.f32 %v460, 0.0
    %v491 = vmax.f32 %v465, 0.0
    %v492 = vmax.f32 %v470, 0.0
    %v493 = vmax.f32 %v475, 0.0
    %v494 = vmul.f32 %v478, %v65
    %v495 = vmul.f32 %v479, %v66
    %v496 = vmul.f32 %v480, %v67
    %v497 = vmul.f32 %v481, %v68
    %v498 = vmul.f32 %v482, %v69
    %v499 = vmul.f32 %v483, %v70
    %v500 = vmul.f32 %v484, %v71
    %v501 = vmul.f32 %v485, %v72
    %v502 = vmul.f32 %v486, %v73
    %v503 = vmul.f32 %v487, %v74
    %v504 = vmul.f32 %v488, %v75
    %v505 = vmul.f32 %v489, %v76
    %v506 = vmul.f32 %v490, %v77
    %v507 = vmul.f32 %v491, %v78
    %v508 = vmul.f32 %v492, %v79
    %v509 = vmul.f32 %v493, %v80
    %510 = vmatprep.subr.mxu0 0.0
    %511 = vmatpush1.msra.mxu0 %v509
    %512 = vmatprep.subr.mxu0 0.0
    %513 = vmatpush1.msra.mxu0 %v508
    %514 = vmatprep.subr.mxu0 0.0
    %515 = vmatpush1.msra.mxu0 %v507
    %516 = vmatprep.subr.mxu0 0.0
    %517 = vmatpush1.msra.mxu0 %v506
    %518 = vmatprep.subr.mxu0 0.0
    %519 = vmatpush1.msra.mxu0 %v505
    %520 = vmatprep.subr.mxu0 0.0
    %521 = vmatpush1.msra.mxu0 %v504
    %522 = vmatprep.subr.mxu0 0.0
    %523 = vmatpush1.msra.mxu0 %v503
    %524 = vmatprep.subr.mxu0 0.0
    %525 = vmatpush1.msra.mxu0 %v502
    %526 = vmatprep.subr.mxu0 0.0
    %527 = vmatpush1.msra.mxu0 %v501
    %528 = vmatprep.subr.mxu0 0.0
    %529 = vmatpush1.msra.mxu0 %v500
    %530 = vmatprep.subr.mxu0 0.0
    %531 = vmatpush1.msra.mxu0 %v499
    %532 = vmatprep.subr.mxu0 0.0
    %533 = vmatpush1.msra.mxu0 %v498
    %534 = vmatprep.subr.mxu0 0.0
    %535 = vmatpush1.msra.mxu0 %v497
    %536 = vmatprep.subr.mxu0 0.0
    %537 = vmatpush1.msra.mxu0 %v496
    %538 = vmatprep.subr.mxu0 0.0
    %539 = vmatpush1.msra.mxu0 %v495
    %540 = vmatprep.subr.mxu0 0.0
    %541 = vmatpush1.msra.mxu0 %v494
    %542 = vmatprep.subr.mxu0 0.0
    %543 = vmatpush2.msra.mxu0 0.0
    %544 = vmatprep.subr.mxu0 0.0
    %545 = vmatpush2.msra.mxu0 0.0
    %546 = vmatprep.subr.mxu0 0.0
    %547 = vmatpush2.msra.mxu0 0.0
    %548 = vmatprep.subr.mxu0 0.0
    %549 = vmatpush2.msra.mxu0 0.0
    %550 = vmatprep.subr.mxu0 0.0
    %551 = vmatpush2.msra.mxu0 0.0
    %552 = vmatprep.subr.mxu0 0.0
    %553 = vmatpush2.msra.mxu0 0.0
    %554 = vmatprep.subr.mxu0 0.0
    %555 = vmatpush2.msra.mxu0 0.0
    %556 = vmatprep.subr.mxu0 0.0
    %557 = vmatpush2.msra.mxu0 0.0
    %558 = vmatprep.subr.mxu0 0.0
    %559 = vmatpush2.msra.mxu0 0.0
    %560 = vmatprep.subr.mxu0 0.0
    %561 = vmatpush2.msra.mxu0 0.0
    %562 = vmatprep.subr.mxu0 0.0
    %563 = vmatpush2.msra.mxu0 0.0
    %564 = vmatprep.subr.mxu0 0.0
    %565 = vmatpush2.msra.mxu0 0.0
    %566 = vmatprep.subr.mxu0 0.0
    %567 = vmatpush2.msra.mxu0 0.0
    %568 = vmatprep.subr.mxu0 0.0
    %569 = vmatpush2.msra.mxu0 0.0
    %570 = vmatprep.subr.mxu0 0.0
    %571 = vmatpush2.msra.mxu0 0.0
    %572 = vmatprep.subr.mxu0 0.0
    %573 = vmatpush2.msra.mxu0 0.0
    %574 = vmatprep.mubr.f32.mxu0 0.0
    %575 = vmatmul.mubr.f32.gmra.mxu0 %v113
    %v576 = vpop.f32.mrf.mxu0
    %v577 = vadd.f32 0.0, %v576
    %v578 = vpop.f32.mrf.mxu0
    %579 = vmatprep.mubr.f32.mxu0 0.0
    %580 = vmatmul.mubr.f32.gmra.mxu0 %v114
    %v581 = vpop.f32.mrf.mxu0
    %v582 = vadd.f32 0.0, %v581
    %v583 = vpop.f32.mrf.mxu0
    %584 = vdwg.mxu0
    %vm585 = vcmask 408576
    %v587 = vsel %vm585, %v577, 0
    %v590 = vsel %vm585, %v582, 0
    %vm592 = vcmask 1041408
    %v594 = vsel %vm592, %v63, 0
    %v597 = vsel %vm592, %v64, 0
    %599 = vmatprep.subr.mxu0 0.0
    %600 = vmatpush1.msra.mxu0 0.0
    %601 = vmatprep.subr.mxu0 0.0
    %602 = vmatpush1.msra.mxu0 0.0
    %603 = vmatprep.subr.mxu0 0.0
    %604 = vmatpush1.msra.mxu0 0.0
    %605 = vmatprep.subr.mxu0 0.0
    %606 = vmatpush1.msra.mxu0 0.0
    %607 = vmatprep.subr.mxu0 0.0
    %608 = vmatpush1.msra.mxu0 0.0
    %609 = vmatprep.subr.mxu0 0.0
    %610 = vmatpush1.msra.mxu0 0.0
    %611 = vmatprep.subr.mxu0 0.0
    %612 = vmatpush1.msra.mxu0 0.0
    %613 = vmatprep.subr.mxu0 0.0
    %614 = vmatpush1.msra.mxu0 0.0
    %615 = vmatprep.subr.mxu0 0.0
    %616 = vmatpush1.msra.mxu0 0.0
    %617 = vmatprep.subr.mxu0 %v597
    %618 = vmatpush1.msra.mxu0 %v594
    %619 = vmatprep.subr.mxu0 %v62
    %620 = vmatpush1.msra.mxu0 %v61
    %621 = vmatprep.subr.mxu0 %v60
    %622 = vmatpush1.msra.mxu0 %v59
    %623 = vmatprep.subr.mxu0 %v58
    %624 = vmatpush1.msra.mxu0 %v57
    %625 = vmatprep.subr.mxu0 %v56
    %626 = vmatpush1.msra.mxu0 %v55
    %627 = vmatprep.subr.mxu0 %v54
    %628 = vmatpush1.msra.mxu0 %v53
    %629 = vmatprep.subr.mxu0 %v52
    %630 = vmatpush1.msra.mxu0 %v51
    %631 = vmatprep.subr.mxu0 0.0
    %632 = vmatpush2.msra.mxu0 0.0
    %633 = vmatprep.subr.mxu0 0.0
    %634 = vmatpush2.msra.mxu0 0.0
    %635 = vmatprep.subr.mxu0 0.0
    %636 = vmatpush2.msra.mxu0 0.0
    %637 = vmatprep.subr.mxu0 0.0
    %638 = vmatpush2.msra.mxu0 0.0
    %639 = vmatprep.subr.mxu0 0.0
    %640 = vmatpush2.msra.mxu0 0.0
    %641 = vmatprep.subr.mxu0 0.0
    %642 = vmatpush2.msra.mxu0 0.0
    %643 = vmatprep.subr.mxu0 0.0
    %644 = vmatpush2.msra.mxu0 0.0
    %645 = vmatprep.subr.mxu0 0.0
    %646 = vmatpush2.msra.mxu0 0.0
    %647 = vmatprep.subr.mxu0 0.0
    %648 = vmatpush2.msra.mxu0 0.0
    %649 = vmatprep.subr.mxu0 0.0
    %650 = vmatpush2.msra.mxu0 0.0
    %651 = vmatprep.subr.mxu0 0.0
    %652 = vmatpush2.msra.mxu0 0.0
    %653 = vmatprep.subr.mxu0 0.0
    %654 = vmatpush2.msra.mxu0 0.0
    %655 = vmatprep.subr.mxu0 0.0
    %656 = vmatpush2.msra.mxu0 0.0
    %657 = vmatprep.subr.mxu0 0.0
    %658 = vmatpush2.msra.mxu0 0.0
    %659 = vmatprep.subr.mxu0 0.0
    %660 = vmatpush2.msra.mxu0 0.0
    %661 = vmatprep.subr.mxu0 0.0
    %662 = vmatpush2.msra.mxu0 0.0
    %663 = vmatprep.mubr.f32.mxu0 0.0
    %664 = vmatmul.mubr.f32.gmra.mxu0 %v587
    %v665 = vpop.f32.mrf.mxu0
    %v666 = vadd.f32 0.0, %v665
    %v667 = vpop.f32.mrf.mxu0
    %v668 = vadd.f32 0.0, %v667
    %669 = vmatprep.mubr.f32.mxu0 0.0
    %670 = vmatmul.mubr.f32.gmra.mxu0 %v590
    %v671 = vpop.f32.mrf.mxu0
    %v672 = vadd.f32 0.0, %v671
    %v673 = vpop.f32.mrf.mxu0
    %v674 = vadd.f32 0.0, %v673
    %675 = vdwg.mxu0
    %v677 = vsel %vm123, %v115, 0
    %v680 = vsel %vm123, %v116, 0
    %682 = vmatprep.subr.mxu0 0.0
    %683 = vmatpush1.msra.mxu0 0.0
    %684 = vmatprep.subr.mxu0 0.0
    %685 = vmatpush1.msra.mxu0 0.0
    %686 = vmatprep.subr.mxu0 0.0
    %687 = vmatpush1.msra.mxu0 0.0
    %688 = vmatprep.subr.mxu0 0.0
    %689 = vmatpush1.msra.mxu0 0.0
    %690 = vmatprep.subr.mxu0 0.0
    %691 = vmatpush1.msra.mxu0 0.0
    %692 = vmatprep.subr.mxu0 0.0
    %693 = vmatpush1.msra.mxu0 0.0
    %694 = vmatprep.subr.mxu0 0.0
    %695 = vmatpush1.msra.mxu0 0.0
    %696 = vmatprep.subr.mxu0 0.0
    %697 = vmatpush1.msra.mxu0 0.0
    %698 = vmatprep.subr.mxu0 0.0
    %699 = vmatpush1.msra.mxu0 0.0
    %700 = vmatprep.subr.mxu0 0.0
    %701 = vmatpush1.msra.mxu0 0.0
    %702 = vmatprep.subr.mxu0 0.0
    %703 = vmatpush1.msra.mxu0 0.0
    %704 = vmatprep.subr.mxu0 0.0
    %705 = vmatpush1.msra.mxu0 0.0
    %706 = vmatprep.subr.mxu0 0.0
    %707 = vmatpush1.msra.mxu0 0.0
    %708 = vmatprep.subr.mxu0 0.0
    %709 = vmatpush1.msra.mxu0 0.0
    %710 = vmatprep.subr.mxu0 %v122
    %711 = vmatpush1.msra.mxu0 %v121
    %712 = vmatprep.subr.mxu0 %v120
    %713 = vmatpush1.msra.mxu0 %v119
    %714 = vmatprep.subr.mxu0 0.0
    %715 = vmatpush2.msra.mxu0 0.0
    %716 = vmatprep.subr.mxu0 0.0
    %717 = vmatpush2.msra.mxu0 0.0
    %718 = vmatprep.subr.mxu0 0.0
    %719 = vmatpush2.msra.mxu0 0.0
    %720 = vmatprep.subr.mxu0 0.0
    %721 = vmatpush2.msra.mxu0 0.0
    %722 = vmatprep.subr.mxu0 0.0
    %723 = vmatpush2.msra.mxu0 0.0
    %724 = vmatprep.subr.mxu0 0.0
    %725 = vmatpush2.msra.mxu0 0.0
    %726 = vmatprep.subr.mxu0 0.0
    %727 = vmatpush2.msra.mxu0 0.0
    %728 = vmatprep.subr.mxu0 0.0
    %729 = vmatpush2.msra.mxu0 0.0
    %730 = vmatprep.subr.mxu0 0.0
    %731 = vmatpush2.msra.mxu0 0.0
    %732 = vmatprep.subr.mxu0 0.0
    %733 = vmatpush2.msra.mxu0 0.0
    %734 = vmatprep.subr.mxu0 0.0
    %735 = vmatpush2.msra.mxu0 0.0
    %736 = vmatprep.subr.mxu0 0.0
    %737 = vmatpush2.msra.mxu0 0.0
    %738 = vmatprep.subr.mxu0 0.0
    %739 = vmatpush2.msra.mxu0 0.0
    %740 = vmatprep.subr.mxu0 0.0
    %741 = vmatpush2.msra.mxu0 0.0
    %742 = vmatprep.subr.mxu0 0.0
    %743 = vmatpush2.msra.mxu0 0.0
    %744 = vmatprep.subr.mxu0 0.0
    %745 = vmatpush2.msra.mxu0 0.0
    %746 = vmatprep.mubr.f32.mxu0 0.0
    %747 = vmatmul.mubr.f32.gmra.mxu0 %v677
    %v748 = vpop.f32.mrf.mxu0
    %v749 = vadd.f32 %v666, %v748
    %v750 = vpop.f32.mrf.mxu0
    %v751 = vadd.f32 %v668, %v750
    %752 = vmatprep.mubr.f32.mxu0 0.0
    %753 = vmatmul.mubr.f32.gmra.mxu0 %v680
    %v754 = vpop.f32.mrf.mxu0
    %v755 = vadd.f32 %v672, %v754
    %v756 = vpop.f32.mrf.mxu0
    %v757 = vadd.f32 %v674, %v756
    %758 = vdwg.mxu0
    %760 = vset.pattern.permute.xlu0 0
    %761 = vperm.xlu0 %760, %v117
    %v762 = vpop.permute.xlu0 %761
    %765 = vset.pattern.permute.xlu0 0
    %766 = vperm.xlu0 %765, %v118
    %v767 = vpop.permute.xlu0 %766
    %v769 = vadd.f32 %v749, %v762
    %v770 = vadd.f32 %v751, %v762
    %v771 = vadd.f32 %v755, %v767
    %v772 = vadd.f32 %v757, %v767
    %v773 = vmax.f32 %v769, 0.0
    %v774 = vmax.f32 %v770, 0.0
    %v775 = vmax.f32 %v771, 0.0
    %v776 = vmax.f32 %v772, 0.0
    %777 = vst [vmem:[#allocation2] sm:$0xff] %v773
    %778 = vst.msk [vmem:[#allocation2 + $0x8] sm:$0xff] %vm123, %v774
    %779 = vst [vmem:[#allocation2 + $0x10] sm:$0xff] %v775
    %780 = vst.msk [vmem:[#allocation2 + $0x18] sm:$0xff] %vm123, %v776
    %s781 = scalar_lea.vmem %s0, 32
    %v782 = vld [vmem:[%s781] sm:$0xff]
    %v783 = vld [vmem:[%s781 + $0x8] sm:$0xff]
    %v784 = vld [vmem:[%s781 + $0x10] sm:$0xff]
    %v785 = vld [vmem:[%s781 + $0x18] sm:$0xff]
    %v787 = vsel %vm123, %v783, 0
    %v790 = vsel %vm123, %v785, 0
    %792 = vmatprep.subr.mxu0 0.0
    %793 = vmatpush1.msra.mxu0 %v48
    %794 = vmatprep.subr.mxu0 0.0
    %795 = vmatpush1.msra.mxu0 %v47
    %796 = vmatprep.subr.mxu0 0.0
    %797 = vmatpush1.msra.mxu0 %v46
    %798 = vmatprep.subr.mxu0 0.0
    %799 = vmatpush1.msra.mxu0 %v45
    %800 = vmatprep.subr.mxu0 0.0
    %801 = vmatpush1.msra.mxu0 %v44
    %802 = vmatprep.subr.mxu0 0.0
    %803 = vmatpush1.msra.mxu0 %v43
    %804 = vmatprep.subr.mxu0 0.0
    %805 = vmatpush1.msra.mxu0 %v42
    %806 = vmatprep.subr.mxu0 0.0
    %807 = vmatpush1.msra.mxu0 %v41
    %808 = vmatprep.subr.mxu0 0.0
    %809 = vmatpush1.msra.mxu0 %v40
    %810 = vmatprep.subr.mxu0 0.0
    %811 = vmatpush1.msra.mxu0 %v39
    %812 = vmatprep.subr.mxu0 0.0
    %813 = vmatpush1.msra.mxu0 %v38
    %814 = vmatprep.subr.mxu0 0.0
    %815 = vmatpush1.msra.mxu0 %v37
    %816 = vmatprep.subr.mxu0 0.0
    %817 = vmatpush1.msra.mxu0 %v36
    %818 = vmatprep.subr.mxu0 0.0
    %819 = vmatpush1.msra.mxu0 %v35
    %820 = vmatprep.subr.mxu0 0.0
    %821 = vmatpush1.msra.mxu0 %v34
    %822 = vmatprep.subr.mxu0 0.0
    %823 = vmatpush1.msra.mxu0 %v33
    %824 = vmatprep.subr.mxu0 0.0
    %825 = vmatpush2.msra.mxu0 0.0
    %826 = vmatprep.subr.mxu0 0.0
    %827 = vmatpush2.msra.mxu0 0.0
    %828 = vmatprep.subr.mxu0 0.0
    %829 = vmatpush2.msra.mxu0 0.0
    %830 = vmatprep.subr.mxu0 0.0
    %831 = vmatpush2.msra.mxu0 0.0
    %832 = vmatprep.subr.mxu0 0.0
    %833 = vmatpush2.msra.mxu0 0.0
    %834 = vmatprep.subr.mxu0 0.0
    %835 = vmatpush2.msra.mxu0 0.0
    %836 = vmatprep.subr.mxu0 0.0
    %837 = vmatpush2.msra.mxu0 0.0
    %838 = vmatprep.subr.mxu0 0.0
    %839 = vmatpush2.msra.mxu0 0.0
    %840 = vmatprep.subr.mxu0 0.0
    %841 = vmatpush2.msra.mxu0 0.0
    %842 = vmatprep.subr.mxu0 0.0
    %843 = vmatpush2.msra.mxu0 0.0
    %844 = vmatprep.subr.mxu0 0.0
    %845 = vmatpush2.msra.mxu0 0.0
    %846 = vmatprep.subr.mxu0 0.0
    %847 = vmatpush2.msra.mxu0 0.0
    %848 = vmatprep.subr.mxu0 0.0
    %849 = vmatpush2.msra.mxu0 0.0
    %850 = vmatprep.subr.mxu0 0.0
    %851 = vmatpush2.msra.mxu0 0.0
    %852 = vmatprep.subr.mxu0 0.0
    %853 = vmatpush2.msra.mxu0 %v50
    %854 = vmatprep.subr.mxu0 0.0
    %855 = vmatpush2.msra.mxu0 %v49
    %856 = vmatprep.mubr.f32.mxu0 %v787
    %857 = vmatmul.mubr.f32.gmra.mxu0 %v782
    %v858 = vpop.f32.mrf.mxu0
    %v859 = vadd.f32 0.0, %v858
    %v860 = vpop.f32.mrf.mxu0
    %861 = vmatprep.mubr.f32.mxu0 %v790
    %862 = vmatmul.mubr.f32.gmra.mxu0 %v784
    %v863 = vpop.f32.mrf.mxu0
    %v864 = vadd.f32 0.0, %v863
    %v865 = vpop.f32.mrf.mxu0
    %866 = vdwg.mxu0
    %867 = vmatprep.subr.mxu0 0.0
    %868 = vmatpush1.msra.mxu0 0.0
    %869 = vmatprep.subr.mxu0 0.0
    %870 = vmatpush1.msra.mxu0 0.0
    %871 = vmatprep.subr.mxu0 0.0
    %872 = vmatpush1.msra.mxu0 0.0
    %873 = vmatprep.subr.mxu0 0.0
    %874 = vmatpush1.msra.mxu0 0.0
    %875 = vmatprep.subr.mxu0 0.0
    %876 = vmatpush1.msra.mxu0 0.0
    %877 = vmatprep.subr.mxu0 0.0
    %878 = vmatpush1.msra.mxu0 0.0
    %879 = vmatprep.subr.mxu0 0.0
    %880 = vmatpush1.msra.mxu0 0.0
    %881 = vmatprep.subr.mxu0 0.0
    %882 = vmatpush1.msra.mxu0 0.0
    %883 = vmatprep.subr.mxu0 0.0
    %884 = vmatpush1.msra.mxu0 0.0
    %885 = vmatprep.subr.mxu0 0.0
    %886 = vmatpush1.msra.mxu0 0.0
    %887 = vmatprep.subr.mxu0 0.0
    %888 = vmatpush1.msra.mxu0 0.0
    %889 = vmatprep.subr.mxu0 0.0
    %890 = vmatpush1.msra.mxu0 0.0
    %891 = vmatprep.subr.mxu0 0.0
    %892 = vmatpush1.msra.mxu0 0.0
    %893 = vmatprep.subr.mxu0 0.0
    %894 = vmatpush1.msra.mxu0 0.0
    %895 = vmatprep.subr.mxu0 0.0
    %896 = vmatpush1.msra.mxu0 %v864
    %897 = vmatprep.subr.mxu0 0.0
    %898 = vmatpush1.msra.mxu0 %v859
    %899 = vmatprep.subr.mxu0 0.0
    %900 = vmatpush2.msra.mxu0 0.0
    %901 = vmatprep.subr.mxu0 0.0
    %902 = vmatpush2.msra.mxu0 0.0
    %903 = vmatprep.subr.mxu0 0.0
    %904 = vmatpush2.msra.mxu0 0.0
    %905 = vmatprep.subr.mxu0 0.0
    %906 = vmatpush2.msra.mxu0 0.0
    %907 = vmatprep.subr.mxu0 0.0
    %908 = vmatpush2.msra.mxu0 0.0
    %909 = vmatprep.subr.mxu0 0.0
    %910 = vmatpush2.msra.mxu0 0.0
    %911 = vmatprep.subr.mxu0 0.0
    %912 = vmatpush2.msra.mxu0 0.0
    %913 = vmatprep.subr.mxu0 0.0
    %914 = vmatpush2.msra.mxu0 0.0
    %915 = vmatprep.subr.mxu0 0.0
    %916 = vmatpush2.msra.mxu0 0.0
    %917 = vmatprep.subr.mxu0 0.0
    %918 = vmatpush2.msra.mxu0 0.0
    %919 = vmatprep.subr.mxu0 0.0
    %920 = vmatpush2.msra.mxu0 0.0
    %921 = vmatprep.subr.mxu0 0.0
    %922 = vmatpush2.msra.mxu0 0.0
    %923 = vmatprep.subr.mxu0 0.0
    %924 = vmatpush2.msra.mxu0 0.0
    %925 = vmatprep.subr.mxu0 0.0
    %926 = vmatpush2.msra.mxu0 0.0
    %927 = vmatprep.subr.mxu0 0.0
    %928 = vmatpush2.msra.mxu0 0.0
    %929 = vmatprep.subr.mxu0 0.0
    %930 = vmatpush2.msra.mxu0 0.0
    %931 = vmatprep.mubr.f32.mxu0 0.0
    %932 = vmatmul.mubr.f32.gmra.mxu0 %v286
    %v933 = vpop.f32.mrf.mxu0
    %v934 = vadd.f32 %v208, %v933
    %v935 = vpop.f32.mrf.mxu0
    %936 = vmatprep.mubr.f32.mxu0 0.0
    %937 = vmatmul.mubr.f32.gmra.mxu0 %v289
    %v938 = vpop.f32.mrf.mxu0
    %v939 = vadd.f32 %v213, %v938
    %v940 = vpop.f32.mrf.mxu0
    %941 = vmatprep.mubr.f32.mxu0 0.0
    %942 = vmatmul.mubr.f32.gmra.mxu0 %v292
    %v943 = vpop.f32.mrf.mxu0
    %v944 = vadd.f32 %v218, %v943
    %v945 = vpop.f32.mrf.mxu0
    %946 = vmatprep.mubr.f32.mxu0 0.0
    %947 = vmatmul.mubr.f32.gmra.mxu0 %v295
    %v948 = vpop.f32.mrf.mxu0
    %v949 = vadd.f32 %v223, %v948
    %v950 = vpop.f32.mrf.mxu0
    %951 = vmatprep.mubr.f32.mxu0 0.0
    %952 = vmatmul.mubr.f32.gmra.mxu0 %v298
    %v953 = vpop.f32.mrf.mxu0
    %v954 = vadd.f32 %v228, %v953
    %v955 = vpop.f32.mrf.mxu0
    %956 = vmatprep.mubr.f32.mxu0 0.0
    %957 = vmatmul.mubr.f32.gmra.mxu0 %v301
    %v958 = vpop.f32.mrf.mxu0
    %v959 = vadd.f32 %v233, %v958
    %v960 = vpop.f32.mrf.mxu0
    %961 = vmatprep.mubr.f32.mxu0 0.0
    %962 = vmatmul.mubr.f32.gmra.mxu0 %v304
    %v963 = vpop.f32.mrf.mxu0
    %v964 = vadd.f32 %v238, %v963
    %v965 = vpop.f32.mrf.mxu0
    %966 = vmatprep.mubr.f32.mxu0 0.0
    %967 = vmatmul.mubr.f32.gmra.mxu0 %v307
    %v968 = vpop.f32.mrf.mxu0
    %v969 = vadd.f32 %v243, %v968
    %v970 = vpop.f32.mrf.mxu0
    %971 = vmatprep.mubr.f32.mxu0 0.0
    %972 = vmatmul.mubr.f32.gmra.mxu0 %v310
    %v973 = vpop.f32.mrf.mxu0
    %v974 = vadd.f32 %v248, %v973
    %v975 = vpop.f32.mrf.mxu0
    %976 = vmatprep.mubr.f32.mxu0 0.0
    %977 = vmatmul.mubr.f32.gmra.mxu0 %v313
    %v978 = vpop.f32.mrf.mxu0
    %v979 = vadd.f32 %v253, %v978
    %v980 = vpop.f32.mrf.mxu0
    %981 = vmatprep.mubr.f32.mxu0 0.0
    %982 = vmatmul.mubr.f32.gmra.mxu0 %v316
    %v983 = vpop.f32.mrf.mxu0
    %v984 = vadd.f32 %v258, %v983
    %v985 = vpop.f32.mrf.mxu0
    %986 = vmatprep.mubr.f32.mxu0 0.0
    %987 = vmatmul.mubr.f32.gmra.mxu0 %v319
    %v988 = vpop.f32.mrf.mxu0
    %v989 = vadd.f32 %v263, %v988
    %v990 = vpop.f32.mrf.mxu0
    %991 = vmatprep.mubr.f32.mxu0 0.0
    %992 = vmatmul.mubr.f32.gmra.mxu0 %v322
    %v993 = vpop.f32.mrf.mxu0
    %v994 = vadd.f32 %v268, %v993
    %v995 = vpop.f32.mrf.mxu0
    %996 = vmatprep.mubr.f32.mxu0 0.0
    %997 = vmatmul.mubr.f32.gmra.mxu0 %v325
    %v998 = vpop.f32.mrf.mxu0
    %v999 = vadd.f32 %v273, %v998
    %v1000 = vpop.f32.mrf.mxu0
    %1001 = vmatprep.mubr.f32.mxu0 0.0
    %1002 = vmatmul.mubr.f32.gmra.mxu0 %v328
    %v1003 = vpop.f32.mrf.mxu0
    %v1004 = vadd.f32 %v278, %v1003
    %v1005 = vpop.f32.mrf.mxu0
    %1006 = vmatprep.mubr.f32.mxu0 0.0
    %1007 = vmatmul.mubr.f32.gmra.mxu0 %v331
    %v1008 = vpop.f32.mrf.mxu0
    %v1009 = vadd.f32 %v283, %v1008
    %v1010 = vpop.f32.mrf.mxu0
    %1011 = vdwg.mxu0
    %v1012 = vmax.f32 %v934, 0.0
    %v1013 = vmax.f32 %v939, 0.0
    %v1014 = vmax.f32 %v944, 0.0
    %v1015 = vmax.f32 %v949, 0.0
    %v1016 = vmax.f32 %v954, 0.0
    %v1017 = vmax.f32 %v959, 0.0
    %v1018 = vmax.f32 %v964, 0.0
    %v1019 = vmax.f32 %v969, 0.0
    %v1020 = vmax.f32 %v974, 0.0
    %v1021 = vmax.f32 %v979, 0.0
    %v1022 = vmax.f32 %v984, 0.0
    %v1023 = vmax.f32 %v989, 0.0
    %v1024 = vmax.f32 %v994, 0.0
    %v1025 = vmax.f32 %v999, 0.0
    %v1026 = vmax.f32 %v1004, 0.0
    %v1027 = vmax.f32 %v1009, 0.0
    %v1028 = vmul.f32 %v1012, %v65
    %v1029 = vmul.f32 %v1013, %v66
    %v1030 = vmul.f32 %v1014, %v67
    %v1031 = vmul.f32 %v1015, %v68
    %v1032 = vmul.f32 %v1016, %v69
    %v1033 = vmul.f32 %v1017, %v70
    %v1034 = vmul.f32 %v1018, %v71
    %v1035 = vmul.f32 %v1019, %v72
    %v1036 = vmul.f32 %v1020, %v73
    %v1037 = vmul.f32 %v1021, %v74
    %v1038 = vmul.f32 %v1022, %v75
    %v1039 = vmul.f32 %v1023, %v76
    %v1040 = vmul.f32 %v1024, %v77
    %v1041 = vmul.f32 %v1025, %v78
    %v1042 = vmul.f32 %v1026, %v79
    %v1043 = vmul.f32 %v1027, %v80
    %1044 = vmatprep.subr.mxu0 0.0
    %1045 = vmatpush1.msra.mxu0 %v1043
    %1046 = vmatprep.subr.mxu0 0.0
    %1047 = vmatpush1.msra.mxu0 %v1042
    %1048 = vmatprep.subr.mxu0 0.0
    %1049 = vmatpush1.msra.mxu0 %v1041
    %1050 = vmatprep.subr.mxu0 0.0
    %1051 = vmatpush1.msra.mxu0 %v1040
    %1052 = vmatprep.subr.mxu0 0.0
    %1053 = vmatpush1.msra.mxu0 %v1039
    %1054 = vmatprep.subr.mxu0 0.0
    %1055 = vmatpush1.msra.mxu0 %v1038
    %1056 = vmatprep.subr.mxu0 0.0
    %1057 = vmatpush1.msra.mxu0 %v1037
    %1058 = vmatprep.subr.mxu0 0.0
    %1059 = vmatpush1.msra.mxu0 %v1036
    %1060 = vmatprep.subr.mxu0 0.0
    %1061 = vmatpush1.msra.mxu0 %v1035
    %1062 = vmatprep.subr.mxu0 0.0
    %1063 = vmatpush1.msra.mxu0 %v1034
    %1064 = vmatprep.subr.mxu0 0.0
    %1065 = vmatpush1.msra.mxu0 %v1033
    %1066 = vmatprep.subr.mxu0 0.0
    %1067 = vmatpush1.msra.mxu0 %v1032
    %1068 = vmatprep.subr.mxu0 0.0
    %1069 = vmatpush1.msra.mxu0 %v1031
    %1070 = vmatprep.subr.mxu0 0.0
    %1071 = vmatpush1.msra.mxu0 %v1030
    %1072 = vmatprep.subr.mxu0 0.0
    %1073 = vmatpush1.msra.mxu0 %v1029
    %1074 = vmatprep.subr.mxu0 0.0
    %1075 = vmatpush1.msra.mxu0 %v1028
    %1076 = vmatprep.subr.mxu0 0.0
    %1077 = vmatpush2.msra.mxu0 0.0
    %1078 = vmatprep.subr.mxu0 0.0
    %1079 = vmatpush2.msra.mxu0 0.0
    %1080 = vmatprep.subr.mxu0 0.0
    %1081 = vmatpush2.msra.mxu0 0.0
    %1082 = vmatprep.subr.mxu0 0.0
    %1083 = vmatpush2.msra.mxu0 0.0
    %1084 = vmatprep.subr.mxu0 0.0
    %1085 = vmatpush2.msra.mxu0 0.0
    %1086 = vmatprep.subr.mxu0 0.0
    %1087 = vmatpush2.msra.mxu0 0.0
    %1088 = vmatprep.subr.mxu0 0.0
    %1089 = vmatpush2.msra.mxu0 0.0
    %1090 = vmatprep.subr.mxu0 0.0
    %1091 = vmatpush2.msra.mxu0 0.0
    %1092 = vmatprep.subr.mxu0 0.0
    %1093 = vmatpush2.msra.mxu0 0.0
    %1094 = vmatprep.subr.mxu0 0.0
    %1095 = vmatpush2.msra.mxu0 0.0
    %1096 = vmatprep.subr.mxu0 0.0
    %1097 = vmatpush2.msra.mxu0 0.0
    %1098 = vmatprep.subr.mxu0 0.0
    %1099 = vmatpush2.msra.mxu0 0.0
    %1100 = vmatprep.subr.mxu0 0.0
    %1101 = vmatpush2.msra.mxu0 0.0
    %1102 = vmatprep.subr.mxu0 0.0
    %1103 = vmatpush2.msra.mxu0 0.0
    %1104 = vmatprep.subr.mxu0 0.0
    %1105 = vmatpush2.msra.mxu0 0.0
    %1106 = vmatprep.subr.mxu0 0.0
    %1107 = vmatpush2.msra.mxu0 0.0
    %1108 = vmatprep.mubr.f32.mxu0 0.0
    %1109 = vmatmul.mubr.f32.gmra.mxu0 %v113
    %v1110 = vpop.f32.mrf.mxu0
    %v1111 = vadd.f32 0.0, %v1110
    %v1112 = vpop.f32.mrf.mxu0
    %1113 = vmatprep.mubr.f32.mxu0 0.0
    %1114 = vmatmul.mubr.f32.gmra.mxu0 %v114
    %v1115 = vpop.f32.mrf.mxu0
    %v1116 = vadd.f32 0.0, %v1115
    %v1117 = vpop.f32.mrf.mxu0
    %1118 = vdwg.mxu0
    %v1120 = vsel %vm585, %v1111, 0
    %v1123 = vsel %vm585, %v1116, 0
    %1125 = vmatprep.subr.mxu0 0.0
    %1126 = vmatpush1.msra.mxu0 0.0
    %1127 = vmatprep.subr.mxu0 0.0
    %1128 = vmatpush1.msra.mxu0 0.0
    %1129 = vmatprep.subr.mxu0 0.0
    %1130 = vmatpush1.msra.mxu0 0.0
    %1131 = vmatprep.subr.mxu0 0.0
    %1132 = vmatpush1.msra.mxu0 0.0
    %1133 = vmatprep.subr.mxu0 0.0
    %1134 = vmatpush1.msra.mxu0 0.0
    %1135 = vmatprep.subr.mxu0 0.0
    %1136 = vmatpush1.msra.mxu0 0.0
    %1137 = vmatprep.subr.mxu0 0.0
    %1138 = vmatpush1.msra.mxu0 0.0
    %1139 = vmatprep.subr.mxu0 0.0
    %1140 = vmatpush1.msra.mxu0 0.0
    %1141 = vmatprep.subr.mxu0 0.0
    %1142 = vmatpush1.msra.mxu0 0.0
    %1143 = vmatprep.subr.mxu0 %v597
    %1144 = vmatpush1.msra.mxu0 %v594
    %1145 = vmatprep.subr.mxu0 %v62
    %1146 = vmatpush1.msra.mxu0 %v61
    %1147 = vmatprep.subr.mxu0 %v60
    %1148 = vmatpush1.msra.mxu0 %v59
    %1149 = vmatprep.subr.mxu0 %v58
    %1150 = vmatpush1.msra.mxu0 %v57
    %1151 = vmatprep.subr.mxu0 %v56
    %1152 = vmatpush1.msra.mxu0 %v55
    %1153 = vmatprep.subr.mxu0 %v54
    %1154 = vmatpush1.msra.mxu0 %v53
    %1155 = vmatprep.subr.mxu0 %v52
    %1156 = vmatpush1.msra.mxu0 %v51
    %1157 = vmatprep.subr.mxu0 0.0
    %1158 = vmatpush2.msra.mxu0 0.0
    %1159 = vmatprep.subr.mxu0 0.0
    %1160 = vmatpush2.msra.mxu0 0.0
    %1161 = vmatprep.subr.mxu0 0.0
    %1162 = vmatpush2.msra.mxu0 0.0
    %1163 = vmatprep.subr.mxu0 0.0
    %1164 = vmatpush2.msra.mxu0 0.0
    %1165 = vmatprep.subr.mxu0 0.0
    %1166 = vmatpush2.msra.mxu0 0.0
    %1167 = vmatprep.subr.mxu0 0.0
    %1168 = vmatpush2.msra.mxu0 0.0
    %1169 = vmatprep.subr.mxu0 0.0
    %1170 = vmatpush2.msra.mxu0 0.0
    %1171 = vmatprep.subr.mxu0 0.0
    %1172 = vmatpush2.msra.mxu0 0.0
    %1173 = vmatprep.subr.mxu0 0.0
    %1174 = vmatpush2.msra.mxu0 0.0
    %1175 = vmatprep.subr.mxu0 0.0
    %1176 = vmatpush2.msra.mxu0 0.0
    %1177 = vmatprep.subr.mxu0 0.0
    %1178 = vmatpush2.msra.mxu0 0.0
    %1179 = vmatprep.subr.mxu0 0.0
    %1180 = vmatpush2.msra.mxu0 0.0
    %1181 = vmatprep.subr.mxu0 0.0
    %1182 = vmatpush2.msra.mxu0 0.0
    %1183 = vmatprep.subr.mxu0 0.0
    %1184 = vmatpush2.msra.mxu0 0.0
    %1185 = vmatprep.subr.mxu0 0.0
    %1186 = vmatpush2.msra.mxu0 0.0
    %1187 = vmatprep.subr.mxu0 0.0
    %1188 = vmatpush2.msra.mxu0 0.0
    %1189 = vmatprep.mubr.f32.mxu0 0.0
    %1190 = vmatmul.mubr.f32.gmra.mxu0 %v1120
    %v1191 = vpop.f32.mrf.mxu0
    %v1192 = vadd.f32 0.0, %v1191
    %v1193 = vpop.f32.mrf.mxu0
    %v1194 = vadd.f32 0.0, %v1193
    %1195 = vmatprep.mubr.f32.mxu0 0.0
    %1196 = vmatmul.mubr.f32.gmra.mxu0 %v1123
    %v1197 = vpop.f32.mrf.mxu0
    %v1198 = vadd.f32 0.0, %v1197
    %v1199 = vpop.f32.mrf.mxu0
    %v1200 = vadd.f32 0.0, %v1199
    %1201 = vdwg.mxu0
    %1202 = vmatprep.subr.mxu0 0.0
    %1203 = vmatpush1.msra.mxu0 0.0
    %1204 = vmatprep.subr.mxu0 0.0
    %1205 = vmatpush1.msra.mxu0 0.0
    %1206 = vmatprep.subr.mxu0 0.0
    %1207 = vmatpush1.msra.mxu0 0.0
    %1208 = vmatprep.subr.mxu0 0.0
    %1209 = vmatpush1.msra.mxu0 0.0
    %1210 = vmatprep.subr.mxu0 0.0
    %1211 = vmatpush1.msra.mxu0 0.0
    %1212 = vmatprep.subr.mxu0 0.0
    %1213 = vmatpush1.msra.mxu0 0.0
    %1214 = vmatprep.subr.mxu0 0.0
    %1215 = vmatpush1.msra.mxu0 0.0
    %1216 = vmatprep.subr.mxu0 0.0
    %1217 = vmatpush1.msra.mxu0 0.0
    %1218 = vmatprep.subr.mxu0 0.0
    %1219 = vmatpush1.msra.mxu0 0.0
    %1220 = vmatprep.subr.mxu0 0.0
    %1221 = vmatpush1.msra.mxu0 0.0
    %1222 = vmatprep.subr.mxu0 0.0
    %1223 = vmatpush1.msra.mxu0 0.0
    %1224 = vmatprep.subr.mxu0 0.0
    %1225 = vmatpush1.msra.mxu0 0.0
    %1226 = vmatprep.subr.mxu0 0.0
    %1227 = vmatpush1.msra.mxu0 0.0
    %1228 = vmatprep.subr.mxu0 0.0
    %1229 = vmatpush1.msra.mxu0 0.0
    %1230 = vmatprep.subr.mxu0 %v785
    %1231 = vmatpush1.msra.mxu0 %v784
    %1232 = vmatprep.subr.mxu0 %v783
    %1233 = vmatpush1.msra.mxu0 %v782
    %1234 = vmatprep.subr.mxu0 0.0
    %1235 = vmatpush2.msra.mxu0 0.0
    %1236 = vmatprep.subr.mxu0 0.0
    %1237 = vmatpush2.msra.mxu0 0.0
    %1238 = vmatprep.subr.mxu0 0.0
    %1239 = vmatpush2.msra.mxu0 0.0
    %1240 = vmatprep.subr.mxu0 0.0
    %1241 = vmatpush2.msra.mxu0 0.0
    %1242 = vmatprep.subr.mxu0 0.0
    %1243 = vmatpush2.msra.mxu0 0.0
    %1244 = vmatprep.subr.mxu0 0.0
    %1245 = vmatpush2.msra.mxu0 0.0
    %1246 = vmatprep.subr.mxu0 0.0
    %1247 = vmatpush2.msra.mxu0 0.0
    %1248 = vmatprep.subr.mxu0 0.0
    %1249 = vmatpush2.msra.mxu0 0.0
    %1250 = vmatprep.subr.mxu0 0.0
    %1251 = vmatpush2.msra.mxu0 0.0
    %1252 = vmatprep.subr.mxu0 0.0
    %1253 = vmatpush2.msra.mxu0 0.0
    %1254 = vmatprep.subr.mxu0 0.0
    %1255 = vmatpush2.msra.mxu0 0.0
    %1256 = vmatprep.subr.mxu0 0.0
    %1257 = vmatpush2.msra.mxu0 0.0
    %1258 = vmatprep.subr.mxu0 0.0
    %1259 = vmatpush2.msra.mxu0 0.0
    %1260 = vmatprep.subr.mxu0 0.0
    %1261 = vmatpush2.msra.mxu0 0.0
    %1262 = vmatprep.subr.mxu0 0.0
    %1263 = vmatpush2.msra.mxu0 0.0
    %1264 = vmatprep.subr.mxu0 0.0
    %1265 = vmatpush2.msra.mxu0 0.0
    %1266 = vmatprep.mubr.f32.mxu0 0.0
    %1267 = vmatmul.mubr.f32.gmra.mxu0 %v677
    %v1268 = vpop.f32.mrf.mxu0
    %v1269 = vadd.f32 %v1192, %v1268
    %v1270 = vpop.f32.mrf.mxu0
    %v1271 = vadd.f32 %v1194, %v1270
    %1272 = vmatprep.mubr.f32.mxu0 0.0
    %1273 = vmatmul.mubr.f32.gmra.mxu0 %v680
    %v1274 = vpop.f32.mrf.mxu0
    %v1275 = vadd.f32 %v1198, %v1274
    %v1276 = vpop.f32.mrf.mxu0
    %v1277 = vadd.f32 %v1200, %v1276
    %1278 = vdwg.mxu0
    %v1279 = vadd.f32 %v1269, %v762
    %v1280 = vadd.f32 %v1271, %v762
    %v1281 = vadd.f32 %v1275, %v767
    %v1282 = vadd.f32 %v1277, %v767
    %v1283 = vmax.f32 %v1279, 0.0
    %v1284 = vmax.f32 %v1280, 0.0
    %v1285 = vmax.f32 %v1281, 0.0
    %v1286 = vmax.f32 %v1282, 0.0
    %s1287 = scalar_lea.vmem [#allocation2], 32
    %1288 = vst [vmem:[%s1287] sm:$0xff] %v1283
    %1289 = vst.msk [vmem:[%s1287 + $0x8] sm:$0xff] %vm123, %v1284
    %1290 = vst [vmem:[%s1287 + $0x10] sm:$0xff] %v1285
    %1291 = vst.msk [vmem:[%s1287 + $0x18] sm:$0xff] %vm123, %v1286
    // Predicated region
    $region38: #{tpu_custom_call.1} parent=1 // pred_check
      _
    $region39: #{tpu_custom_call.1} parent=1 // pred_check_branch
      %1293 = sbr.rel (0) target = $region41
    $region40: #{tpu_custom_call.1} parent=1 // pred_region
      %s1295 = ssub.s32 1024, 1024
      %1296 = vsyncadd [#allocation3], %s1295
      %s1297 = sshll.u32 [#allocation2], 4
      %s1298 = int_to_ptr.vmem [resolvable:$true] %s1297
      %1303 = dma.vmem_to_hbm [thread:$0]  %s1298, 1024, %s9, [#allocation3], 256, 256, 16
    $region41: #{tpu_custom_call.1} parent=1 // pred_fallthru
      _
    // Predicated region
    $region42: #{tpu_custom_call.1} parent=1 // pred_check
      _
    $region43: #{tpu_custom_call.1} parent=1 // pred_check_branch
      %1305 = sbr.rel (0) target = $region45
    $region44: #{tpu_custom_call.1} parent=1 // pred_region
      %1306 = dma.done [#allocation3], 1024
    $region45: #{tpu_custom_call.1} parent=1 // pred_fallthru
      _
    %1307 = vsyncpa [#allocation3], 1

</llo_original>
